<compile_context>
chip_gen: v6e
topology: v6e:2x2x1
jax: 0.10.0
libtpu: 0.0.40
codegen_flags: <defaults>
</compile_context>

<pallas_src>
import functools

import jax
import jax.numpy as jnp
from jax import lax
from jax.experimental import pallas as pl
from jax.experimental.pallas import tpu as pltpu


def _round_up(x, m):
    return ((x + m - 1) // m) * m


def _cdiv(a, b):
    return (a + b - 1) // b


def _ce_kernel(pred_ref, tgt_ref, out_ref, m_sc, l_sc, p_sc, *,
               ignore_index, n_rows, n_classes, tile_m, tile_c):
    """One (row-tile, class-chunk) step of cross-entropy with online logsumexp.

    pred_ref: (TM, TC) logits chunk
    tgt_ref : (TM, 1)  int32 targets for this row tile
    out_ref : (1, 8, 128) lane-dense per-row-tile output
              (sublane 0 = sum of NLL over valid rows, sublane 1 = valid count)
    m_sc / l_sc / p_sc: (TM, 1) f32 running max / sum-of-exp / picked logit
    """
    i = pl.program_id(0)          # row-tile index
    c = pl.program_id(1)          # class-chunk index
    nc = pl.num_programs(1)

    @pl.when(c == 0)
    def _():
        m_sc[...] = jnp.full(m_sc.shape, -jnp.inf, jnp.float32)
        l_sc[...] = jnp.zeros(l_sc.shape, jnp.float32)
        p_sc[...] = jnp.zeros(p_sc.shape, jnp.float32)

    logits = pred_ref[...].astype(jnp.float32)                  # (TM, TC)
    tgt = tgt_ref[...]                                           # (TM, 1)

    # Hoisted (1, TC) class-index iota; broadcasts against the (TM, 1) targets.
    col = lax.broadcasted_iota(jnp.int32, (1, tile_c), 1) + c * tile_c

    if n_classes % tile_c != 0:
        # Ragged last class chunk: OOB lanes contain garbage -> mask to -inf.
        logits = jnp.where(col < n_classes, logits, -jnp.inf)

    # Online (streaming) logsumexp over class chunks.
    chunk_max = jnp.max(logits, axis=-1, keepdims=True)          # (TM, 1)
    m_prev = m_sc[...]
    m_new = jnp.maximum(m_prev, chunk_max)
    shifted = logits - m_new                                     # reused below
    l_sc[...] = (l_sc[...] * jnp.exp(m_prev - m_new)
                 + jnp.sum(jnp.exp(shifted), axis=-1, keepdims=True))
    m_sc[...] = m_new

    # Target pick (no dynamic gather on TPU): only the chunk that contains the
    # target class contributes; reuse `shifted` and add the running max back.
    hit = (tgt >= c * tile_c) & (tgt < (c + 1) * tile_c)          # (TM, 1)
    picked = jnp.sum(jnp.where(col == tgt, shifted, 0.0),
                     axis=-1, keepdims=True)                      # (TM, 1)
    p_sc[...] += picked + jnp.where(hit, m_new, 0.0)

    @pl.when(c == nc - 1)
    def _():
        # Global row index masks both ignore_index rows and the garbage rows of
        # a ragged last row tile (OOB block reads).
        row = i * tile_m + lax.broadcasted_iota(jnp.int32, (tile_m, 1), 0)
        valid = (row < n_rows) & (tgt != ignore_index)
        nll = jnp.where(valid, m_sc[...] + jnp.log(l_sc[...]) - p_sc[...], 0.0)
        nll_sum = jnp.sum(nll)
        cnt = jnp.sum(valid.astype(jnp.float32))
        sub = lax.broadcasted_iota(jnp.int32, (1, 8, 128), 1)
        out_ref[...] = jnp.where(sub == 0, nll_sum, cnt)


def _choose_tiles(M, C, itemsize, *, max_tile_m=8192, max_tile_c=2048):
    """Pick row/class tile sizes from a generation-aware VMEM budget."""
    try:
        vmem_cap = int(pltpu.get_tpu_info().vmem_capacity_bytes)
    except Exception:
        vmem_cap = 64 * 1024 * 1024            # conservative (v7x per-core)
    # ~85% of physical, capped at 100 MiB (v5e/v6e: 128 MiB, v7x: 64 MiB).
    vmem_limit = min(int(vmem_cap * 0.85), 100 * 1024 * 1024)

    tile_c = C if C <= max_tile_c else max_tile_c   # multiple of 128 if chunked
    c_pad = _round_up(tile_c, 128)                  # lane padding in VMEM

    # Per-row VMEM: double-buffered pred block + ~3 full-width f32 temporaries
    # (f32 upcast / shifted / exp-or-select) + lane-padded (TM, 1) buffers
    # (targets x2 buffers, 3 scratch accumulators, misc per-row temps).
    per_row = 2 * c_pad * itemsize + 3 * c_pad * 4 + 10 * 512

    tile_m = (vmem_limit - (2 << 20)) // per_row
    tile_m = min(tile_m, max_tile_m)
    # Keep at least 2 row tiles so the "parallel" axis can use both v7x cores.
    tile_m = min(tile_m, _round_up(_cdiv(M, 2), 8))
    tile_m = max(8, (tile_m // 8) * 8)
    if M < 8:
        tile_m = M     # block dim must equal the full dim when smaller than 8
    return int(tile_m), int(tile_c), int(vmem_limit)


def cross_entropy_loss(pred, target, loss_weight=1.0, *,
                       ignore_index=-100, tile_m=None, tile_c=None):
    """loss_weight * F.cross_entropy(pred.permute(0, 2, 1), target) ('mean').

    pred: (N, L, C) float logits; target: (N, L) int class ids.
    """
    N, L, C = pred.shape
    M = N * L

    pred2d = pred.reshape(M, C)
    tgt2d = target.reshape(M, 1).astype(jnp.int32)

    tm, tc, vmem_limit = _choose_tiles(M, C, jnp.dtype(pred.dtype).itemsize)
    if tile_m is not None:
        tm = tile_m
    if tile_c is not None:
        tc = tile_c

    n_row_tiles = _cdiv(M, tm)
    n_cls_tiles = _cdiv(C, tc)

    kernel = functools.partial(
        _ce_kernel, ignore_index=ignore_index, n_rows=M, n_classes=C,
        tile_m=tm, tile_c=tc)

    partials = pl.pallas_call(
        kernel,
        out_shape=jax.ShapeDtypeStruct((n_row_tiles, 8, 128), jnp.float32),
        grid_spec=pltpu.PrefetchScalarGridSpec(
            num_scalar_prefetch=0,
            grid=(n_row_tiles, n_cls_tiles),
            in_specs=[
                pl.BlockSpec((tm, tc), lambda i, c: (i, c)),
                pl.BlockSpec((tm, 1), lambda i, c: (i, 0)),
            ],
            out_specs=pl.BlockSpec((1, 8, 128), lambda i, c: (i, 0, 0)),
            scratch_shapes=[pltpu.VMEM((tm, 1), jnp.float32)] * 3,
        ),
        compiler_params=pltpu.CompilerParams(
            dimension_semantics=("parallel", "arbitrary"),
            vmem_limit_bytes=vmem_limit,
        ),
    )(pred2d, tgt2d)

    total = jnp.sum(partials[:, 0, 0])
    n_valid = jnp.sum(partials[:, 1, 0])
    # NOTE: PyTorch 'mean' returns NaN when every target is ignore_index;
    # this returns 0 instead (deliberate, documented divergence).
    n_valid = jnp.maximum(n_valid, 1.0)
    return (jnp.float32(loss_weight) * total / n_valid).astype(jnp.float32)


if __name__ == "__main__":
    def ref_loss(p, t, w):
        logp = jax.nn.log_softmax(p.astype(jnp.float32), axis=-1)
        nll = -jnp.take_along_axis(logp, t[..., None].astype(jnp.int32), axis=-1)
        return w * jnp.mean(nll)

    key = jax.random.PRNGKey(0)
    k1, k2, k3, k4 = jax.random.split(key, 4)

    # Shapes implied by forward(): pred (N, L, C) logits, target (N, L) ids.
    N, L, C = 2, 8, 16
    pred = jax.random.normal(k1, (N, L, C), dtype=jnp.float32)
    target = jax.random.randint(k2, (N, L), 0, C, dtype=jnp.int32)
    loss = cross_entropy_loss(pred, target, loss_weight=1.0)
    jax.block_until_ready(loss)
    ref = ref_loss(pred, target, 1.0)
    assert jnp.allclose(loss, ref, rtol=1e-5, atol=1e-5), (loss, ref)

    # Exercise the ragged-row-tile + class-chunked online-logsumexp paths with
    # small forced tiles (M=74 not a multiple of 32, C=300 not a multiple of 128).
    N2, L2, C2 = 2, 37, 300
    pred2 = jax.random.normal(k3, (N2, L2, C2), dtype=jnp.float32)
    target2 = jax.random.randint(k4, (N2, L2), 0, C2, dtype=jnp.int32)
    loss2 = cross_entropy_loss(pred2, target2, loss_weight=0.5,
                               tile_m=32, tile_c=128)
    jax.block_until_ready(loss2)
    ref2 = ref_loss(pred2, target2, 0.5)
    assert jnp.allclose(loss2, ref2, rtol=1e-5, atol=1e-5), (loss2, ref2)

    print("KERNEL_OK")
</pallas_src>

<mosaic_0001>
module attributes {stable_mosaic.version = 11 : i64} {
  func.func @_ce_kernel(%arg0: i32, %arg1: i32, %arg2: memref<8x16xf32, #tpu.memory_space<vmem>>, %arg3: memref<8x1xi32, #tpu.memory_space<vmem>>, %arg4: memref<1x8x128xf32, #tpu.memory_space<vmem>>, %arg5: memref<8x1xf32, #tpu.memory_space<vmem>>, %arg6: memref<8x1xf32, #tpu.memory_space<vmem>>, %arg7: memref<8x1xf32, #tpu.memory_space<vmem>>) attributes {dimension_semantics = [#tpu.dimension_semantics<parallel>, #tpu.dimension_semantics<arbitrary>], iteration_bounds = array<i64: 2, 1>, scalar_prefetch = 0 : i64, scratch_operands = 3 : i64, tpu.core_type = #tpu.core_type<tc>, window_params = [{transform_indices = @transform_0, window_bounds = array<i64: 8, 16>}, {transform_indices = @transform_1, window_bounds = array<i64: 8, 1>}, {transform_indices = @transform_2, window_bounds = array<i64: 1, 8, 128>}]} {
    %c0_i32 = arith.constant 0 : i32
    %0 = arith.cmpi eq, %arg1, %c0_i32 : i32
    %1 = arith.extui %0 : i1 to i32
    %c0_i32_0 = arith.constant 0 : i32
    %2 = arith.cmpi ne, %1, %c0_i32_0 : i32
    scf.if %2 {
      %cst_24 = arith.constant 0xFF800000 : f32
      %49 = vector.broadcast %cst_24 : f32 to vector<8x1xf32>
      %c0_25 = arith.constant 0 : index
      %c0_26 = arith.constant 0 : index
      %50 = vector.load %arg5[%c0_25, %c0_26] : memref<8x1xf32, #tpu.memory_space<vmem>>, vector<8x1xf32>
      tpu.vector_store %arg5[%c0_25, %c0_26], %49 {strides = array<i32>} : memref<8x1xf32, #tpu.memory_space<vmem>>, vector<8x1xf32>,
      %cst_27 = arith.constant 0.000000e+00 : f32
      %51 = vector.broadcast %cst_27 : f32 to vector<8x1xf32>
      %c0_28 = arith.constant 0 : index
      %c0_29 = arith.constant 0 : index
      %52 = vector.load %arg6[%c0_28, %c0_29] : memref<8x1xf32, #tpu.memory_space<vmem>>, vector<8x1xf32>
      tpu.vector_store %arg6[%c0_28, %c0_29], %51 {strides = array<i32>} : memref<8x1xf32, #tpu.memory_space<vmem>>, vector<8x1xf32>,
      %cst_30 = arith.constant 0.000000e+00 : f32
      %53 = vector.broadcast %cst_30 : f32 to vector<8x1xf32>
      %c0_31 = arith.constant 0 : index
      %c0_32 = arith.constant 0 : index
      %54 = vector.load %arg7[%c0_31, %c0_32] : memref<8x1xf32, #tpu.memory_space<vmem>>, vector<8x1xf32>
      tpu.vector_store %arg7[%c0_31, %c0_32], %53 {strides = array<i32>} : memref<8x1xf32, #tpu.memory_space<vmem>>, vector<8x1xf32>,
    } else {
    }
    %c0 = arith.constant 0 : index
    %c0_1 = arith.constant 0 : index
    %3 = vector.load %arg2[%c0, %c0_1] : memref<8x16xf32, #tpu.memory_space<vmem>>, vector<8x16xf32>
    %c0_2 = arith.constant 0 : index
    %c0_3 = arith.constant 0 : index
    %4 = vector.load %arg3[%c0_2, %c0_3] : memref<8x1xi32, #tpu.memory_space<vmem>>, vector<8x1xi32>
    %5 = tpu.iota {dimensions = array<i32: 1>} : vector<1x16xi32>
    %c16_i32 = arith.constant 16 : i32
    %6 = arith.muli %arg1, %c16_i32 : i32
    %7 = vector.broadcast %6 : i32 to vector<1x16xi32>
    %8 = arith.addi %5, %7 : vector<1x16xi32>
    %cst = arith.constant dense<0xFF800000> : vector<8xf32>
    %9 = vector.multi_reduction <maximumf>, %3, %cst [1] : vector<8x16xf32> to vector<8xf32>
    %10 = vector.shape_cast %9 : vector<8xf32> to vector<8x1xf32>
    %c0_4 = arith.constant 0 : index
    %c0_5 = arith.constant 0 : index
    %11 = vector.load %arg5[%c0_4, %c0_5] : memref<8x1xf32, #tpu.memory_space<vmem>>, vector<8x1xf32>
    %12 = arith.maximumf %11, %10 : vector<8x1xf32>
    %13 = vector.broadcast %12 : vector<8x1xf32> to vector<8x16xf32>
    %14 = arith.subf %3, %13 : vector<8x16xf32>
    %c0_6 = arith.constant 0 : index
    %c0_7 = arith.constant 0 : index
    %15 = vector.load %arg6[%c0_6, %c0_7] : memref<8x1xf32, #tpu.memory_space<vmem>>, vector<8x1xf32>
    %16 = arith.subf %11, %12 : vector<8x1xf32>
    %17 = math.exp %16 : vector<8x1xf32>
    %18 = arith.mulf %15, %17 : vector<8x1xf32>
    %19 = math.exp %14 : vector<8x16xf32>
    %cst_8 = arith.constant dense<0.000000e+00> : vector<8xf32>
    %20 = vector.multi_reduction <add>, %19, %cst_8 [1] : vector<8x16xf32> to vector<8xf32>
    %21 = vector.shape_cast %20 : vector<8xf32> to vector<8x1xf32>
    %22 = arith.addf %18, %21 : vector<8x1xf32>
    %c0_9 = arith.constant 0 : index
    %c0_10 = arith.constant 0 : index
    %23 = vector.load %arg6[%c0_9, %c0_10] : memref<8x1xf32, #tpu.memory_space<vmem>>, vector<8x1xf32>
    tpu.vector_store %arg6[%c0_9, %c0_10], %22 {strides = array<i32>} : memref<8x1xf32, #tpu.memory_space<vmem>>, vector<8x1xf32>,
    %c0_11 = arith.constant 0 : index
    %c0_12 = arith.constant 0 : index
    %24 = vector.load %arg5[%c0_11, %c0_12] : memref<8x1xf32, #tpu.memory_space<vmem>>, vector<8x1xf32>
    tpu.vector_store %arg5[%c0_11, %c0_12], %12 {strides = array<i32>} : memref<8x1xf32, #tpu.memory_space<vmem>>, vector<8x1xf32>,
    %c16_i32_13 = arith.constant 16 : i32
    %25 = arith.muli %arg1, %c16_i32_13 : i32
    %26 = vector.broadcast %25 : i32 to vector<8x1xi32>
    %27 = arith.cmpi sge, %4, %26 : vector<8x1xi32>
    %c1_i32 = arith.constant 1 : i32
    %28 = arith.addi %arg1, %c1_i32 : i32
    %c16_i32_14 = arith.constant 16 : i32
    %29 = arith.muli %28, %c16_i32_14 : i32
    %30 = vector.broadcast %29 : i32 to vector<8x1xi32>
    %31 = arith.cmpi slt, %4, %30 : vector<8x1xi32>
    %32 = arith.andi %27, %31 : vector<8x1xi1>
    %33 = vector.broadcast %8 : vector<1x16xi32> to vector<8x16xi32>
    %34 = vector.broadcast %4 : vector<8x1xi32> to vector<8x16xi32>
    %35 = arith.cmpi eq, %33, %34 : vector<8x16xi32>
    %cst_15 = arith.constant 0.000000e+00 : f32
    %36 = vector.broadcast %cst_15 : f32 to vector<8x16xf32>
    %37 = arith.select %35, %14, %36 : vector<8x16xi1>, vector<8x16xf32>
    %cst_16 = arith.constant dense<0.000000e+00> : vector<8xf32>
    %38 = vector.multi_reduction <add>, %37, %cst_16 [1] : vector<8x16xf32> to vector<8xf32>
    %39 = vector.shape_cast %38 : vector<8xf32> to vector<8x1xf32>
    %c0_17 = arith.constant 0 : index
    %c0_18 = arith.constant 0 : index
    %40 = vector.load %arg7[%c0_17, %c0_18] : memref<8x1xf32, #tpu.memory_space<vmem>>, vector<8x1xf32>
    %cst_19 = arith.constant 0.000000e+00 : f32
    %41 = vector.broadcast %cst_19 : f32 to vector<8x1xf32>
    %42 = arith.select %32, %12, %41 : vector<8x1xi1>, vector<8x1xf32>
    %43 = arith.addf %39, %42 : vector<8x1xf32>
    %44 = arith.addf %40, %43 : vector<8x1xf32>
    %c0_20 = arith.constant 0 : index
    %c0_21 = arith.constant 0 : index
    %45 = vector.load %arg7[%c0_20, %c0_21] : memref<8x1xf32, #tpu.memory_space<vmem>>, vector<8x1xf32>
    tpu.vector_store %arg7[%c0_20, %c0_21], %44 {strides = array<i32>} : memref<8x1xf32, #tpu.memory_space<vmem>>, vector<8x1xf32>,
    %c0_i32_22 = arith.constant 0 : i32
    %46 = arith.cmpi eq, %arg1, %c0_i32_22 : i32
    %47 = arith.extui %46 : i1 to i32
    %c0_i32_23 = arith.constant 0 : i32
    %48 = arith.cmpi ne, %47, %c0_i32_23 : i32
    scf.if %48 {
      %c8_i32 = arith.constant 8 : i32
      %49 = arith.muli %arg0, %c8_i32 : i32
      %50 = tpu.iota {dimensions = array<i32: 0>} : vector<8x1xi32>
      %51 = vector.broadcast %49 : i32 to vector<8x1xi32>
      %52 = arith.addi %51, %50 : vector<8x1xi32>
      %c16_i32_24 = arith.constant 16 : i32
      %53 = vector.broadcast %c16_i32_24 : i32 to vector<8x1xi32>
      %54 = arith.cmpi slt, %52, %53 : vector<8x1xi32>
      %c-100_i32 = arith.constant -100 : i32
      %55 = vector.broadcast %c-100_i32 : i32 to vector<8x1xi32>
      %56 = arith.cmpi ne, %4, %55 : vector<8x1xi32>
      %57 = arith.andi %54, %56 : vector<8x1xi1>
      %c0_25 = arith.constant 0 : index
      %c0_26 = arith.constant 0 : index
      %58 = vector.load %arg5[%c0_25, %c0_26] : memref<8x1xf32, #tpu.memory_space<vmem>>, vector<8x1xf32>
      %c0_27 = arith.constant 0 : index
      %c0_28 = arith.constant 0 : index
      %59 = vector.load %arg6[%c0_27, %c0_28] : memref<8x1xf32, #tpu.memory_space<vmem>>, vector<8x1xf32>
      %60 = math.log %59 : vector<8x1xf32>
      %61 = arith.addf %58, %60 : vector<8x1xf32>
      %c0_29 = arith.constant 0 : index
      %c0_30 = arith.constant 0 : index
      %62 = vector.load %arg7[%c0_29, %c0_30] : memref<8x1xf32, #tpu.memory_space<vmem>>, vector<8x1xf32>
      %63 = arith.subf %61, %62 : vector<8x1xf32>
      %cst_31 = arith.constant 0.000000e+00 : f32
      %64 = vector.broadcast %cst_31 : f32 to vector<8x1xf32>
      %65 = arith.select %57, %63, %64 : vector<8x1xi1>, vector<8x1xf32>
      %66 = vector.shape_cast %65 : vector<8x1xf32> to vector<1x8x1xf32>
      %cst_32 = arith.constant dense<0.000000e+00> : vector<1xf32>
      %67 = vector.multi_reduction <add>, %66, %cst_32 [1, 2] : vector<1x8x1xf32> to vector<1xf32>
      %68 = vector.shape_cast %67 : vector<1xf32> to vector<1x1x1xf32>
      %69 = vector.extract %68[0, 0, 0] : f32 from vector<1x1x1xf32>
      %70 = arith.extui %57 : vector<8x1xi1> to vector<8x1xi32>
      %71 = arith.sitofp %70 : vector<8x1xi32> to vector<8x1xf32>
      %72 = vector.shape_cast %71 : vector<8x1xf32> to vector<1x8x1xf32>
      %cst_33 = arith.constant dense<0.000000e+00> : vector<1xf32>
      %73 = vector.multi_reduction <add>, %72, %cst_33 [1, 2] : vector<1x8x1xf32> to vector<1xf32>
      %74 = vector.shape_cast %73 : vector<1xf32> to vector<1x1x1xf32>
      %75 = vector.extract %74[0, 0, 0] : f32 from vector<1x1x1xf32>
      %76 = tpu.iota {dimensions = array<i32: 1>} : vector<1x8x128xi32>
      %c0_i32_34 = arith.constant 0 : i32
      %77 = vector.broadcast %c0_i32_34 : i32 to vector<1x8x128xi32>
      %78 = arith.cmpi eq, %76, %77 : vector<1x8x128xi32>
      %79 = vector.broadcast %69 : f32 to vector<1x8x128xf32>
      %80 = vector.broadcast %75 : f32 to vector<1x8x128xf32>
      %81 = arith.select %78, %79, %80 : vector<1x8x128xi1>, vector<1x8x128xf32>
      %c0_35 = arith.constant 0 : index
      %c0_36 = arith.constant 0 : index
      %c0_37 = arith.constant 0 : index
      %82 = vector.load %arg4[%c0_35, %c0_36, %c0_37] : memref<1x8x128xf32, #tpu.memory_space<vmem>>, vector<1x8x128xf32>
      tpu.vector_store %arg4[%c0_35, %c0_36, %c0_37], %81 {strides = array<i32>} : memref<1x8x128xf32, #tpu.memory_space<vmem>>, vector<1x8x128xf32>,
    } else {
    }
    return
  }
  func.func @transform_0(%arg0: i32, %arg1: i32) -> (i32, i32) {
    %c0_i32 = arith.constant 0 : i32
    return %arg0, %arg1 : i32, i32
  }
  func.func @transform_1(%arg0: i32, %arg1: i32) -> (i32, i32) {
    %c0_i32 = arith.constant 0 : i32
    %c0_i32_0 = arith.constant 0 : i32
    return %arg0, %c0_i32 : i32, i32
  }
  func.func @transform_2(%arg0: i32, %arg1: i32) -> (i32, i32, i32) {
    %c0_i32 = arith.constant 0 : i32
    %c0_i32_0 = arith.constant 0 : i32
    %c0_i32_1 = arith.constant 0 : i32
    return %arg0, %c0_i32, %c0_i32_0 : i32, i32, i32
  }
}

</mosaic_0001>

<llo_original>
// kernel: tpu_custom_call.1
$region0: #{tpu_custom_call.1}
  #allocation0 [shape = 'u32[]', space=smem, size = 0x4, offset = 0x4, fixed_abs, tag = 'smem constant byte address 0x4 - core index']
  #allocation1 [shape = 'u32[144,128]{1,0:T(1,128)}', space=vmem, size = 0x12000, scoped, tag = 'internal scratch']
  #allocation2 [shape = 'f32[8,1]{1,0:T(8,128)}', space=vmem, size = 0x1000, scoped, tag = 'scratch operand']
  #allocation3 [shape = 'f32[8,1]{1,0:T(8,128)}', space=vmem, size = 0x1000, scoped, tag = 'scratch operand']
  #allocation4 [shape = 'f32[8,1]{1,0:T(8,128)}', space=vmem, size = 0x1000, scoped, tag = 'scratch operand']
  %s0 = inlined_call_operand.vmem [shape: f32[16,16], index: 0, kind: input, shape index: {}]
  %s1 = inlined_call_operand.vmem [shape: s32[16,1], index: 1, kind: input, shape index: {}]
  %s2 = inlined_call_operand.hbm [shape: f32[2,8,128], index: 2, kind: output, shape index: {}]
  %s3 = sld [smem:[#allocation0]]
  $region49: #{tpu_custom_call.1} parent=0
    _
  %s5 = ssub.s32 1, %s3
  %s6 = scalar_select 0, %s5, %s3
  $region1: #{tpu_custom_call.1} parent=0
    #allocation5 [shape = 'u8[8192]{0}', space=vmem, size = 0x2000, scoped, tag = 'output window, operand 0']
    #allocation6 [shape = 's32[2]{0}', space=sflag, size = 0x8, scoped, tag = 'scoped memory for tpu_custom_call.1']
    %7 = vsyncpa [#allocation6], 0
    %s8 = scalar_lea.sflag [#allocation6], 1
    %9 = vsyncpa %s8, 0
    loop: start=0, step=1, limit=4
    $region2: #{tpu_custom_call.1} parent=1 // loop_pre_header
      _
    $region3: #{tpu_custom_call.1} parent=1 // loop_header
      %s11 = sphi 0, %s15
      %p12 = scmp.ge.s32.totalorder %s11, 4
      %s18 = sphi 0, %s30
      %s19 = sphi 0, %s26
      %s20 = sphi 0, %s18
      %s21 = sphi 0, %s19
      %s22 = sphi 0, %s20
      %s23 = sphi 0, %s21
      %s35 = sphi 0, %s37
      %s38 = sphi 0, %s35
      %s39 = sphi 0, %s38
      %s55 = sphi 0, %s39
      %s61 = sphi 0, %s63
      %s64 = sphi 0, %s61
      %s65 = sphi 0, %s64
      %s81 = sphi 0, %s65
      %s87 = sphi 0, %s89
      %s90 = sphi 0, %s87
      %s91 = sphi 0, %s90
      %s107 = sphi 0, %s91
    $region4: #{tpu_custom_call.1} parent=1 // loop_header_branch
      %14 = sbr.rel (%p12) target = $region8
    $region5: #{tpu_custom_call.1} parent=1 // loop_body
      %s16 = ssub.s32 %s11, 1
      %s17 = ssub.s32 %s11, 2
      %s24 = sadd.s32 1, %s19
      %p25 = scmp.ge.s32.totalorder %s24, 1
      %s26 = scalar_select %p25, 0, %s24
      %s27 = sadd.s32 1, %s18
      %s28 = scalar_select %p25, %s27, %s18
      %p29 = scmp.ge.s32.totalorder %s28, 2
      %s30 = scalar_select %p29, 0, %s28
      %s31 = ssub.s32 %s18, %s30
      %s32 = ssub.s32 %s19, %s26
      %s33 = sor.u32 %s31, %s32
      %p34 = scmp.eq.s32.totalorder %s33, 0
      %s36 = sadd.s32 %s35, 1
      %s37 = scalar_select %p34, %s35, %s36
      %p40 = pneg %p34
      %p41 = scmp.eq.s32.totalorder %s11, 1
      %p42 = por %p40, %p41
      %p43 = scmp.ne.s32.totalorder %s35, %s38
      %p44 = scmp.eq.s32.totalorder %s11, 0
      %p45 = por %p43, %p44
      %p46 = scmp.ne.s32.totalorder %s35, %s38
      %p47 = scmp.eq.s32.totalorder %s16, 1
      %p48 = por %p46, %p47
      %p49 = scmp.ne.s32.totalorder %s38, %s39
      %p50 = scmp.eq.s32.totalorder %s16, 0
      %p51 = por %p49, %p50
      %p52 = scmp.ne.s32.totalorder %s38, %s39
      %p53 = scmp.eq.s32.totalorder %s17, 1
      %p54 = por %p52, %p53
      %p56 = scmp.ne.s32.totalorder %s39, %s55
      %p57 = scmp.eq.s32.totalorder %s17, 0
      %p58 = por %p56, %p57
      %s59 = ssub.s32 %s18, %s30
      %p60 = scmp.eq.s32.totalorder %s59, 0
      %s62 = sadd.s32 %s61, 1
      %s63 = scalar_select %p60, %s61, %s62
      %p66 = pneg %p60
      %p67 = scmp.eq.s32.totalorder %s11, 1
      %p68 = por %p66, %p67
      %p69 = scmp.ne.s32.totalorder %s61, %s64
      %p70 = scmp.eq.s32.totalorder %s11, 0
      %p71 = por %p69, %p70
      %p72 = scmp.ne.s32.totalorder %s61, %s64
      %p73 = scmp.eq.s32.totalorder %s16, 1
      %p74 = por %p72, %p73
      %p75 = scmp.ne.s32.totalorder %s64, %s65
      %p76 = scmp.eq.s32.totalorder %s16, 0
      %p77 = por %p75, %p76
      %p78 = scmp.ne.s32.totalorder %s64, %s65
      %p79 = scmp.eq.s32.totalorder %s17, 1
      %p80 = por %p78, %p79
      %p82 = scmp.ne.s32.totalorder %s65, %s81
      %p83 = scmp.eq.s32.totalorder %s17, 0
      %p84 = por %p82, %p83
      %s85 = ssub.s32 %s18, %s30
      %p86 = scmp.eq.s32.totalorder %s85, 0
      %s88 = sadd.s32 %s87, 1
      %s89 = scalar_select %p86, %s87, %s88
      %p92 = pneg %p86
      %p93 = scmp.eq.s32.totalorder %s11, 1
      %p94 = por %p92, %p93
      %p95 = scmp.ne.s32.totalorder %s87, %s90
      %p96 = scmp.eq.s32.totalorder %s11, 0
      %p97 = por %p95, %p96
      %p98 = scmp.ne.s32.totalorder %s87, %s90
      %p99 = scmp.eq.s32.totalorder %s16, 1
      %p100 = por %p98, %p99
      %p101 = scmp.ne.s32.totalorder %s90, %s91
      %p102 = scmp.eq.s32.totalorder %s16, 0
      %p103 = por %p101, %p102
      %p104 = scmp.ne.s32.totalorder %s90, %s91
      %p105 = scmp.eq.s32.totalorder %s17, 1
      %p106 = por %p104, %p105
      %p108 = scmp.ne.s32.totalorder %s91, %s107
      %p109 = scmp.eq.s32.totalorder %s17, 0
      %p110 = por %p108, %p109
      %p111 = scmp.le.s32.totalorder 1, %s11
      %p112 = scmp.lt.s32.totalorder %s11, 3
      %p113 = pnand %p111, %p112
      %p114 = pneg %p113
      // Predicated region
      $region9: #{tpu_custom_call.1} parent=5 // pred_check
        _
      $region10: #{tpu_custom_call.1} parent=5 // pred_check_branch
        %116 = sbr.rel (%p113) target = $region12
      $region11: #{tpu_custom_call.1} parent=5 // pred_region
        %s117 = ssub.s32 %s11, 1
      $region12: #{tpu_custom_call.1} parent=5 // pred_fallthru
        _
      %p118 = scmp.lt.s32.totalorder %s11, 2
      // Predicated region
      $region13: #{tpu_custom_call.1} parent=5 // pred_check
        %p119 = pneg %p118
      $region14: #{tpu_custom_call.1} parent=5 // pred_check_branch
        %121 = sbr.rel (%p119) target = $region16
      $region15: #{tpu_custom_call.1} parent=5 // pred_region
        // Predicated region
        $region17: #{tpu_custom_call.1} parent=15 // pred_check
          %p122 = pneg %p45
        $region18: #{tpu_custom_call.1} parent=15 // pred_check_branch
          %124 = sbr.rel (%p122) target = $region20
        $region19: #{tpu_custom_call.1} parent=15 // pred_region
          %p125 = scmp.lt.s32.totalorder %s18, 1
          %s126 = scalar_select %p125, %s18, 1
          %p127 = scmp.lt.s32.totalorder %s19, 0
          %s128 = scalar_select %p127, %s19, 0
          %s129 = sadd.s32 %s128, %s126
          %s130 = smul.addr %s129, 8
          %s131 = scalar_lea.vmem %s0, %s130
        $region20: #{tpu_custom_call.1} parent=15 // pred_fallthru
          _
        // Predicated region
        $region21: #{tpu_custom_call.1} parent=15 // pred_check
          %p132 = pneg %p71
        $region22: #{tpu_custom_call.1} parent=15 // pred_check_branch
          %134 = sbr.rel (%p132) target = $region24
        $region23: #{tpu_custom_call.1} parent=15 // pred_region
          %p135 = scmp.lt.s32.totalorder %s18, 1
          %s136 = scalar_select %p135, %s18, 1
          %s137 = smul.addr %s136, 8
          %s138 = scalar_lea.vmem %s1, %s137
        $region24: #{tpu_custom_call.1} parent=15 // pred_fallthru
          _
      $region16: #{tpu_custom_call.1} parent=5 // pred_fallthru
        _
      %p139 = scmp.le.s32.totalorder 1, %s11
      %p140 = scmp.lt.s32.totalorder %s11, 3
      %p141 = pnand %p139, %p140
      %p142 = pneg %p141
      // Predicated region
      $region25: #{tpu_custom_call.1} parent=5 // pred_check
        _
      $region26: #{tpu_custom_call.1} parent=5 // pred_check_branch
        %144 = sbr.rel (%p141) target = $region28
      $region27: #{tpu_custom_call.1} parent=5 // pred_region
        %s145 = ssub.s32 %s11, 1
        %p146 = scmp.lt.s32.totalorder %s20, 1
        %s147 = scalar_select %p146, %s20, 1
        %p148 = scmp.lt.s32.totalorder %s21, 0
        %s149 = scalar_select %p148, %s21, 0
        %s150 = sadd.s32 %s149, %s147
        %s151 = smul.addr %s150, 8
        %s152 = scalar_lea.vmem %s0, %s151
        %p153 = pneg %p51
        %p154 = pneg %p48
        %p155 = scmp.lt.s32.totalorder %s20, 1
        %s156 = scalar_select %p155, %s20, 1
        %s157 = smul.addr %s156, 8
        %s158 = scalar_lea.vmem %s1, %s157
        %p159 = pneg %p77
        %p160 = pneg %p74
        %p161 = pneg %p103
        %p162 = pneg %p100
        %s163 = sand.u32 %s90, 1
        %s164 = scalar_lea.sflag [#allocation6], %s163
        %s165 = sand.u32 %s90, 1
        %s166 = smul.addr %s165, 8
        %s167 = scalar_lea.vmem [#allocation5], %s166
        %p168 = scmp.lt.s32.totalorder %s20, 1
        %s169 = scalar_select %p168, %s20, 1
        %p170 = scmp.lt.s32.totalorder %s21, 0
        %s171 = scalar_select %p170, %s21, 0
        %s172 = sadd.s32 %s171, %s169
        %s173 = smul.addr %s172, 8
        %s174 = scalar_lea.vmem %s0, %s173
        %p175 = scmp.lt.s32.totalorder %s20, 1
        %s176 = scalar_select %p175, %s20, 1
        %s177 = smul.addr %s176, 8
        %s178 = scalar_lea.vmem %s1, %s177
        %p179 = scmp.eq.s32.totalorder %s21, 0
        // Predicated region
        $region29: #{tpu_custom_call.1} parent=27 // pred_check
          %p180 = pneg %p179
        $region30: #{tpu_custom_call.1} parent=27 // pred_check_branch
          %182 = sbr.rel (%p180) target = $region32
        $region31: #{tpu_custom_call.1} parent=27 // pred_region
          %vm183 = vcmask 7168
          %184 = vst.msk [vmem:[#allocation2] sm:$0xff] %vm183, -inf
          %185 = vst.msk [vmem:[#allocation3] sm:$0xff] %vm183, 0.0
          %186 = vst.msk [vmem:[#allocation4] sm:$0xff] %vm183, 0.0
        $region32: #{tpu_custom_call.1} parent=27 // pred_fallthru
          _
        %v187 = vld [vmem:[%s174] sm:$0xff]
        %v188 = vld [vmem:[%s178] sm:$0xff]
        %v189 = vlaneseq
        %v190 = vand.u32 %v189, 127
        %s191 = smul.u32 %s21, 16
        %v192 = vstv %s191
        %v193 = vadd.s32 %v190, %v192
        %vm194 = vcmask 130048
        %v195 = vsel %vm194, %v187, -inf
        %196 = vmax.xlane.f32.xlu0 %v195
        %v197 = vpop.xlane.xlu0 %196
        %v198 = vld [vmem:[#allocation2] sm:$0xff]
        %v199 = vmax.f32 %v198, %v197
        %201 = vset.pattern.permute.xlu0 0
        %202 = vperm.xlu0 %201, %v199
        %v203 = vpop.permute.xlu0 %202
        %v205 = vsub.f32 %v187, %v203
        %v206 = vld [vmem:[#allocation3] sm:$0xff]
        %v207 = vsub.f32 %v198, %v199
        %v208 = vmul.f32 %v207, 1.442695
        %v209 = vpow.pop %v208
        %v210 = vmul.f32 %v206, %v209
        %v211 = vmul.f32 %v205, 1.442695
        %v212 = vpow.pop %v211
        %v213 = vsel %vm194, %v212, 0.0
        %214 = vadd.xlane.f32.xlu0 %v213
        %v215 = vpop.xlane.xlu0 %214
        %v216 = vadd.f32 %v210, %v215
        %vm217 = vcmask 7168
        %218 = vst.msk [vmem:[#allocation3] sm:$0xff] %vm217, %v216
        %219 = vst.msk [vmem:[#allocation2] sm:$0xff] %vm217, %v199
        %vm220 = vcmp.ge.s32.totalorder %v188, %v192
        %s221 = sadd.s32 %s21, 1
        %s222 = smul.u32 %s221, 16
        %v223 = vstv %s222
        %vm224 = vcmp.lt.s32.totalorder %v188, %v223
        %vm225 = vmand %vm220, %vm224
        %226 = vset.pattern.permute.xlu0 0
        %227 = vperm.xlu0 %226, %v188
        %v228 = vpop.permute.xlu0 %227
        %vm229 = vcmp.eq.s32.totalorder %v193, %v228
        %v230 = vsel %vm229, %v205, 0.0
        %v231 = vsel %vm194, %v230, 0.0
        %232 = vadd.xlane.f32.xlu0 %v231
        %v233 = vpop.xlane.xlu0 %232
        %v234 = vld [vmem:[#allocation4] sm:$0xff]
        %v235 = vsel %vm225, %v199, 0.0
        %v236 = vadd.f32 %v233, %v235
        %v237 = vadd.f32 %v234, %v236
        %238 = vst.msk [vmem:[#allocation4] sm:$0xff] %vm217, %v237
        // Predicated region
        $region33: #{tpu_custom_call.1} parent=27 // pred_check
          %p239 = pneg %p179
        $region34: #{tpu_custom_call.1} parent=27 // pred_check_branch
          %241 = sbr.rel (%p239) target = $region36
        $region35: #{tpu_custom_call.1} parent=27 // pred_region
          %s242 = smul.u32 %s20, 8
          %v243 = vlaneseq
          %v244 = vshrl.u32 %v243, 7
          %v245 = vstv %s242
          %v246 = vadd.s32 %v245, %v244
          %vm247 = vcmp.lt.s32.totalorder %v246, 16
          %vm248 = vcmp.ne.s32.totalorder %v188, 4294967196
          %vm249 = vmand %vm247, %vm248
          %v250 = vld [vmem:[#allocation2] sm:$0xff]
          %v251 = vld [vmem:[#allocation3] sm:$0xff]
          %v252 = vlog2.pop %v251
          %v253 = vmul.f32 %v252, 0.6931472
          %v254 = vadd.f32 %v250, %v253
          %v255 = vld [vmem:[#allocation4] sm:$0xff]
          %v256 = vsub.f32 %v254, %v255
          %v257 = vsel %vm249, %v256, 0.0
          %v258 = vsel %vm217, %v257, 0.0
          %259 = vadd.xlane.f32.xlu0 %v258
          %v260 = vpop.xlane.xlu0 %259
          %v261 = vrot.slane %v260, 4
          %v262 = vadd.f32 %v260, %v261
          %v263 = vrot.slane %v262, 2
          %v264 = vadd.f32 %v262, %v263
          %v265 = vrot.slane %v264, 1
          %v266 = vadd.f32 %v264, %v265
          %s267 = vtos %v266
          %v268 = vsel %vm249, 1, 0
          %v269 = vcvt.s32.f32 %v268
          %v270 = vsel %vm217, %v269, 0.0
          %271 = vadd.xlane.f32.xlu0 %v270
          %v272 = vpop.xlane.xlu0 %271
          %v273 = vrot.slane %v272, 4
          %v274 = vadd.f32 %v272, %v273
          %v275 = vrot.slane %v274, 2
          %v276 = vadd.f32 %v274, %v275
          %v277 = vrot.slane %v276, 1
          %v278 = vadd.f32 %v276, %v277
          %s279 = vtos %v278
          %vm280 = vcmp.eq.s32.totalorder %v244, 0
          %v281 = vstv %s267
          %v282 = vstv %s279
          %v283 = vsel %vm280, %v281, %v282
          %284 = vst [vmem:[%s167] sm:$0xff] %v283
        $region36: #{tpu_custom_call.1} parent=27 // pred_fallthru
          _
        %s285 = sand.u32 %s90, 1
        %s286 = scalar_lea.sflag [#allocation6], %s285
        %s287 = sand.u32 %s90, 1
        %s288 = smul.addr %s287, 8
        %s289 = scalar_lea.vmem [#allocation5], %s288
        // Predicated region
        $region37: #{tpu_custom_call.1} parent=27 // pred_check
          %p290 = pneg %p100
        $region38: #{tpu_custom_call.1} parent=27 // pred_check_branch
          %292 = sbr.rel (%p290) target = $region40
        $region39: #{tpu_custom_call.1} parent=27 // pred_region
          %s294 = ssub.s32 128, 128
          %295 = vsyncadd %s286, %s294
          %s296 = smul.addr %s20, 128
          %s297 = scalar_lea.hbm %s2, %s296
          %s299 = sshll.u32 %s289, 4
          %s300 = int_to_ptr.vmem [resolvable:$true] %s299
          %302 = dma.vmem_to_hbm [thread:$0]  %s300, 128, %s297, %s286
        $region40: #{tpu_custom_call.1} parent=27 // pred_fallthru
          _
      $region28: #{tpu_custom_call.1} parent=5 // pred_fallthru
        _
      %p303 = scmp.le.s32.totalorder 2, %s11
      // Predicated region
      $region41: #{tpu_custom_call.1} parent=5 // pred_check
        %p304 = pneg %p303
      $region42: #{tpu_custom_call.1} parent=5 // pred_check_branch
        %306 = sbr.rel (%p304) target = $region44
      $region43: #{tpu_custom_call.1} parent=5 // pred_region
        %s307 = ssub.s32 %s11, 2
        // Predicated region
        $region45: #{tpu_custom_call.1} parent=43 // pred_check
          %p308 = pneg %p106
        $region46: #{tpu_custom_call.1} parent=43 // pred_check_branch
          %310 = sbr.rel (%p308) target = $region48
        $region47: #{tpu_custom_call.1} parent=43 // pred_region
          %s311 = sand.u32 %s91, 1
          %s312 = scalar_lea.sflag [#allocation6], %s311
          %s313 = sand.u32 %s91, 1
          %s314 = smul.addr %s313, 8
          %s315 = scalar_lea.vmem [#allocation5], %s314
          %316 = dma.done %s312, 128
        $region48: #{tpu_custom_call.1} parent=43 // pred_fallthru
          _
      $region44: #{tpu_custom_call.1} parent=5 // pred_fallthru
        _
    $region6: #{tpu_custom_call.1} parent=1 // loop_footer
      %s15 = sadd.s32 1, %s11
    $region7: #{tpu_custom_call.1} parent=1 // loop_footer_branch
      %10 = sbr.rel target = $region3
    $region8: #{tpu_custom_call.1} parent=1 // loop_exit
      _
    %317 = vsyncpa [#allocation6], 1
    %s318 = scalar_lea.sflag [#allocation6], 1
    %319 = vsyncpa %s318, 1

</llo_original>
